<compile_context>
chip_gen: v7x
topology: tpu7x:2x2x1
jax: 0.10.0
libtpu: 0.0.40
codegen_flags: <defaults>
</compile_context>

<pallas_src>
import numpy as np
import jax
import jax.numpy as jnp
from jax.experimental import pallas as pl
from jax.experimental.pallas import tpu as pltpu

LATENT_DIM = 128           # module default is 768 (also a multiple of 128);
                           # kept small for the demo, kernel is agnostic.
C_IN, C_OUT = 2, 64        # nn.Conv2d(2, 64, kernel_size=3, stride=2, padding=1)
KH = KW = 3
STRIDE, PAD = 2, 1
CKK = C_IN * KH * KW       # 18
POOL_HW = 7                # nn.AdaptiveAvgPool2d((7, 7))
NPOOL = POOL_HW * POOL_HW  # 49

_VMEM_BUDGET = 16 << 20    # conservative vs v7x 32 MiB scoped default


# ---------------------------------------------------------------------------
# Kernel: one lane-dense matmul (conv+pool+flatten+fc all folded into w_ref)
# ---------------------------------------------------------------------------
def fused_encoder_kernel(patches_ref, w_ref, b_ref, out_ref):
    # patches_ref: (F, HoWo*18)  bf16, lane-dense im2col patches
    # w_ref      : (HoWo*18, L)  bf16, folded conv*pool*fc weight (resident)
    # b_ref      : (1, L)        f32, fused bias (resident)
    # out_ref    : (F, L)        f32, lane-dense
    out_ref[...] = (jnp.dot(patches_ref[...], w_ref[...],
                            preferred_element_type=jnp.float32)
                    + b_ref[...])


# ---------------------------------------------------------------------------
# Helpers / glue
# ---------------------------------------------------------------------------
def _adaptive_pool_matrix(h_in, w_in, h_out, w_out):
    """Exact PyTorch AdaptiveAvgPool2d as a (h_out*w_out, h_in*w_in) matrix."""
    P = np.zeros((h_out * w_out, h_in * w_in), np.float32)
    for i in range(h_out):
        y0, y1 = (i * h_in) // h_out, -(-((i + 1) * h_in) // h_out)
        for j in range(w_out):
            x0, x1 = (j * w_in) // w_out, -(-((j + 1) * w_in) // w_out)
            w = 1.0 / ((y1 - y0) * (x1 - x0))
            for yy in range(y0, y1):
                for xx in range(x0, x1):
                    P[i * w_out + j, yy * w_in + xx] = w
    return P


def prepare_params(params, H, W):
    """One-time param prep (outside jit).

    Folds conv weight + pooling matrix + fc weight + both biases into a single
    (HoWo*18, L) bf16 matrix and a (1, L) f32 fused bias (the module has no
    nonlinearity, so the whole forward pass is linear).
    """
    wconv, bconv, wfc, bfc = params
    Ho = (H + 2 * PAD - KH) // STRIDE + 1
    Wo = (W + 2 * PAD - KW) // STRIDE + 1
    L = wfc.shape[0]

    poolm = jnp.asarray(_adaptive_pool_matrix(Ho, Wo, POOL_HW, POOL_HW))  # (49, HoWo)
    wfc_r = jnp.asarray(wfc, jnp.float32).reshape(L, C_OUT, NPOOL)        # (L, 64, 49)
    wconv_f = jnp.asarray(wconv, jnp.float32).reshape(C_OUT, CKK)         # (64, 18)

    # W3[s*18+k, l] = sum_{c,p} wfc[l, c*49+p] * poolm[p, s] * wconv[c, k]
    w3 = jnp.einsum('lcp,ps,ck->skl', wfc_r, poolm, wconv_f)              # (HoWo, 18, L)
    w3 = w3.reshape(Ho * Wo * CKK, L).astype(jnp.bfloat16)

    # Each pool row sums to 1, so conv bias folds as sum_{c,p} wfc[l,c,p]*bconv[c].
    bias = (jnp.einsum('lcp,c->l', wfc_r, jnp.asarray(bconv, jnp.float32))
            + jnp.asarray(bfc, jnp.float32)).reshape(1, L)
    return w3, bias


def _pick_f_blk(BS, K, latent):
    """Largest multiple-of-8 frame tile that fits VMEM; prefer grid >= 2."""
    resident = 2 * (K * latent * 2) + 2 * (latent * 4)        # double-buffered weights
    budget = _VMEM_BUDGET - resident
    cands = [f for f in range(8, BS + 1, 8) if BS % f == 0]
    if not cands:
        return BS                                             # one full-array step
    def fits(f):                                              # patches bf16 + out f32, x2 buffers
        return 2 * (f * K * 2) + 2 * (f * latent * 4) <= budget
    fitting = [f for f in cands if fits(f)] or [cands[0]]
    two_step = [f for f in fitting if BS // f >= 2]           # keep both v7x TCs busy
    return max(two_step) if two_step else max(fitting)


def optical_flow_encoder(x, kparams):
    w3, bias = kparams
    B, S, one, C, H, W = x.shape
    assert one == 1 and C == C_IN
    BS = B * S
    Ho = (H + 2 * PAD - KH) // STRIDE + 1
    Wo = (W + 2 * PAD - KW) // STRIDE + 1
    K = Ho * Wo * CKK
    assert w3.shape[0] == K
    latent = w3.shape[1]

    # ---- im2col (XLA glue), built directly lane-dense and in bf16 ----------
    # patches_flat[bs, (oy*Wo+ox)*18 + ic*9 + ky*3 + kx]
    xs = x.reshape(BS, C, H, W).astype(jnp.bfloat16)
    xp = jnp.pad(xs, ((0, 0), (0, 0), (PAD, PAD), (PAD, PAD)))
    cols = []
    for ky in range(KH):
        for kx in range(KW):
            cols.append(xp[:, :, ky:ky + STRIDE * Ho:STRIDE,
                           kx:kx + STRIDE * Wo:STRIDE])          # (BS, 2, Ho, Wo)
    pat = jnp.stack(cols, axis=-1)                               # (BS, 2, Ho, Wo, 9)
    pat = jnp.moveaxis(pat, 1, 3)                                # (BS, Ho, Wo, 2, 9)
    patches_flat = pat.reshape(BS, K)                            # (BS, HoWo*18) bf16

    f_blk = _pick_f_blk(BS, K, latent)
    grid = (BS // f_blk,)

    out = pl.pallas_call(
        fused_encoder_kernel,
        out_shape=jax.ShapeDtypeStruct((BS, latent), jnp.float32),
        grid_spec=pltpu.PrefetchScalarGridSpec(
            num_scalar_prefetch=0,
            grid=grid,
            in_specs=[
                pl.BlockSpec((f_blk, K), lambda i: (i, 0)),
                pl.BlockSpec((K, latent), lambda i: (0, 0)),     # resident weight
                pl.BlockSpec((1, latent), lambda i: (0, 0)),     # resident bias
            ],
            out_specs=pl.BlockSpec((f_blk, latent), lambda i: (i, 0)),
        ),
        compiler_params=pltpu.CompilerParams(
            dimension_semantics=("parallel",),
            vmem_limit_bytes=32 * 1024 * 1024,
        ),
    )(patches_flat, w3, bias)

    return out.reshape(B, S, latent)


# ---------------------------------------------------------------------------
# Pure-JAX reference matching the PyTorch semantics (f32, original layouts)
# ---------------------------------------------------------------------------
def _adaptive_pool_ref(x, out_hw):
    N, C, H, W = x.shape
    rows = []
    for i in range(out_hw):
        y0, y1 = (i * H) // out_hw, -(-((i + 1) * H) // out_hw)
        cols = []
        for j in range(out_hw):
            x0, x1 = (j * W) // out_hw, -(-((j + 1) * W) // out_hw)
            cols.append(jnp.mean(x[:, :, y0:y1, x0:x1], axis=(2, 3)))
        rows.append(jnp.stack(cols, axis=-1))
    return jnp.stack(rows, axis=-2)                              # (N, C, 7, 7)


def reference(x, params):
    wconv, bconv, wfc, bfc = params
    B, S, _, C, H, W = x.shape
    xs = x.reshape(B * S, C, H, W)
    conv = jax.lax.conv_general_dilated(
        xs, wconv, window_strides=(STRIDE, STRIDE),
        padding=((PAD, PAD), (PAD, PAD)),
        dimension_numbers=("NCHW", "OIHW", "NCHW")) + bconv[None, :, None, None]
    pooled = _adaptive_pool_ref(conv, POOL_HW)
    flat = pooled.reshape(B * S, -1)
    out = flat @ wfc.T + bfc
    return out.reshape(B, S, wfc.shape[0])


if __name__ == "__main__":
    key = jax.random.PRNGKey(0)
    kx, k1, k2, k3, k4 = jax.random.split(key, 5)

    B, S, H, W = 2, 8, 16, 16
    x = jax.random.normal(kx, (B, S, 1, C_IN, H, W), jnp.float32)

    # deterministic synthetic parameters (shapes follow the PyTorch module)
    wconv = 0.1 * jax.random.normal(k1, (C_OUT, C_IN, KH, KW), jnp.float32)
    bconv = 0.01 * jax.random.normal(k2, (C_OUT,), jnp.float32)
    wfc = 0.02 * jax.random.normal(k3, (LATENT_DIM, C_OUT * NPOOL), jnp.float32)
    bfc = 0.01 * jax.random.normal(k4, (LATENT_DIM,), jnp.float32)
    params = (wconv, bconv, wfc, bfc)

    # one-time param prep (linear fold of conv+pool+fc+biases), outside jit
    kparams = prepare_params(params, H, W)

    enc = jax.jit(optical_flow_encoder)
    out = jax.block_until_ready(enc(x, kparams))

    ref = reference(x, params)
    assert out.shape == (B, S, LATENT_DIM)
    max_err = float(jnp.max(jnp.abs(out - ref)))
    if not jnp.allclose(out, ref, rtol=2e-2, atol=2e-2):
        raise AssertionError(f"mismatch vs reference, max abs err = {max_err}")
    print("KERNEL_OK")
</pallas_src>

<mosaic_0001>
module attributes {stable_mosaic.version = 11 : i64} {
  func.func @fused_encoder_kernel(%arg0: i32, %arg1: memref<8x1152xbf16, #tpu.memory_space<vmem>>, %arg2: memref<1152x128xbf16, #tpu.memory_space<vmem>>, %arg3: memref<1x128xf32, #tpu.memory_space<vmem>>, %arg4: memref<8x128xf32, #tpu.memory_space<vmem>>) attributes {dimension_semantics = [#tpu.dimension_semantics<parallel>], iteration_bounds = array<i64: 2>, scalar_prefetch = 0 : i64, scratch_operands = 0 : i64, tpu.core_type = #tpu.core_type<tc>, window_params = [{transform_indices = @transform_0, window_bounds = array<i64: 8, 1152>}, {pipeline_mode = #tpu.pipeline_mode<synchronous>, transform_indices = @transform_1, window_bounds = array<i64: 1152, 128>}, {pipeline_mode = #tpu.pipeline_mode<synchronous>, transform_indices = @transform_2, window_bounds = array<i64: 1, 128>}, {transform_indices = @transform_3, window_bounds = array<i64: 8, 128>}]} {
    %c0 = arith.constant 0 : index
    %c0_0 = arith.constant 0 : index
    %0 = vector.load %arg1[%c0, %c0_0] : memref<8x1152xbf16, #tpu.memory_space<vmem>>, vector<8x1152xbf16>
    %c0_1 = arith.constant 0 : index
    %c0_2 = arith.constant 0 : index
    %1 = vector.load %arg2[%c0_1, %c0_2] : memref<1152x128xbf16, #tpu.memory_space<vmem>>, vector<1152x128xbf16>
    %cst = arith.constant dense<0.000000e+00> : vector<8x128xf32>
    %2 = tpu.matmul %0, %1, %cst {dimension_numbers = #tpu.dot_dimension_numbers<[1], [0], [0], [1], [0, 0, 1, 1], [], []>} : vector<8x1152xbf16>, vector<1152x128xbf16>, vector<8x128xf32> -> vector<8x128xf32>
    %c0_3 = arith.constant 0 : index
    %c0_4 = arith.constant 0 : index
    %3 = vector.load %arg3[%c0_3, %c0_4] : memref<1x128xf32, #tpu.memory_space<vmem>>, vector<1x128xf32>
    %4 = vector.broadcast %3 : vector<1x128xf32> to vector<8x128xf32>
    %5 = arith.addf %2, %4 : vector<8x128xf32>
    %c0_5 = arith.constant 0 : index
    %c0_6 = arith.constant 0 : index
    %6 = vector.load %arg4[%c0_5, %c0_6] : memref<8x128xf32, #tpu.memory_space<vmem>>, vector<8x128xf32>
    tpu.vector_store %arg4[%c0_5, %c0_6], %5 {strides = array<i32>} : memref<8x128xf32, #tpu.memory_space<vmem>>, vector<8x128xf32>,
    return
  }
  func.func @transform_0(%arg0: i32) -> (i32, i32) {
    %c0_i32 = arith.constant 0 : i32
    %c0_i32_0 = arith.constant 0 : i32
    return %arg0, %c0_i32 : i32, i32
  }
  func.func @transform_1(%arg0: i32) -> (i32, i32) {
    %c0_i32 = arith.constant 0 : i32
    %c0_i32_0 = arith.constant 0 : i32
    %c0_i32_1 = arith.constant 0 : i32
    return %c0_i32, %c0_i32_0 : i32, i32
  }
  func.func @transform_2(%arg0: i32) -> (i32, i32) {
    %c0_i32 = arith.constant 0 : i32
    %c0_i32_0 = arith.constant 0 : i32
    %c0_i32_1 = arith.constant 0 : i32
    return %c0_i32, %c0_i32_0 : i32, i32
  }
  func.func @transform_3(%arg0: i32) -> (i32, i32) {
    %c0_i32 = arith.constant 0 : i32
    %c0_i32_0 = arith.constant 0 : i32
    return %arg0, %c0_i32 : i32, i32
  }
}

</mosaic_0001>

<llo_original>
// kernel: optical_flow_encoder.1
$region0: #{optical_flow_encoder.1}
  #allocation0 [shape = 'u32[]', space=smem, size = 0x4, offset = 0x4, fixed_abs, tag = 'smem constant byte address 0x4 - core index']
  #allocation1 [shape = 'u32[144,128]{1,0:T(1,128)}', space=vmem, size = 0x12000, scoped, tag = 'internal scratch']
  %s0 = inlined_call_operand.vmem [shape: bf16[16,1152], index: 0, kind: input, shape index: {}]
  %s1 = inlined_call_operand.vmem [shape: bf16[1152,128], index: 1, kind: input, shape index: {}]
  %s2 = inlined_call_operand.vmem [shape: f32[1,128], index: 2, kind: input, shape index: {}]
  %s3 = inlined_call_operand.hbm [shape: f32[16,128], index: 3, kind: output, shape index: {}]
  %s4 = sld [smem:[#allocation0]]
  $region45: #{optical_flow_encoder.1} parent=0
    _
  %s6 = ssub.s32 1, %s4
  %s7 = scalar_select 0, %s6, %s4
  $region1: #{optical_flow_encoder.1} parent=0
    #allocation2 [shape = 'u8[8192]{0}', space=vmem, size = 0x2000, scoped, tag = 'output window, operand 0']
    #allocation3 [shape = 's32[2]{0}', space=sflag, size = 0x8, scoped, tag = 'scoped memory for optical_flow_encoder.1']
    %8 = vsyncpa [#allocation3], 0
    %s9 = scalar_lea.sflag [#allocation3], 1
    %10 = vsyncpa %s9, 0
    loop: start=0, step=1, limit=4
    $region2: #{optical_flow_encoder.1} parent=1 // loop_pre_header
      _
    $region3: #{optical_flow_encoder.1} parent=1 // loop_header
      %s12 = sphi 0, %s16
      %p13 = scmp.ge.s32.totalorder %s12, 4
      %s22 = sphi 0, %s24
      %s25 = sphi 0, %s22
      %s26 = sphi 0, %s25
      %s42 = sphi 0, %s26
      %s46 = sphi 0, %s46
      %s48 = sphi 0, %s46
      %s49 = sphi 0, %s48
      %s63 = sphi 0, %s49
      %s67 = sphi 0, %s67
      %s69 = sphi 0, %s67
      %s70 = sphi 0, %s69
      %s84 = sphi 0, %s70
      %s90 = sphi 0, %s92
      %s93 = sphi 0, %s90
      %s94 = sphi 0, %s93
      %s110 = sphi 0, %s94
    $region4: #{optical_flow_encoder.1} parent=1 // loop_header_branch
      %15 = sbr.rel (%p13) target = $region8
    $region5: #{optical_flow_encoder.1} parent=1 // loop_body
      %s17 = ssub.s32 %s12, 1
      %s18 = ssub.s32 %s12, 2
      %s19 = sadd.s32 %s12, 1
      %s20 = ssub.s32 %s12, %s19
      %p21 = scmp.eq.s32.totalorder %s20, 0
      %s23 = sadd.s32 %s22, 1
      %s24 = scalar_select %p21, %s22, %s23
      %p27 = pneg %p21
      %p28 = scmp.eq.s32.totalorder %s12, 1
      %p29 = por %p27, %p28
      %p30 = scmp.ne.s32.totalorder %s22, %s25
      %p31 = scmp.eq.s32.totalorder %s12, 0
      %p32 = por %p30, %p31
      %p33 = scmp.ne.s32.totalorder %s22, %s25
      %p34 = scmp.eq.s32.totalorder %s17, 1
      %p35 = por %p33, %p34
      %p36 = scmp.ne.s32.totalorder %s25, %s26
      %p37 = scmp.eq.s32.totalorder %s17, 0
      %p38 = por %p36, %p37
      %p39 = scmp.ne.s32.totalorder %s25, %s26
      %p40 = scmp.eq.s32.totalorder %s18, 1
      %p41 = por %p39, %p40
      %p43 = scmp.ne.s32.totalorder %s26, %s42
      %p44 = scmp.eq.s32.totalorder %s18, 0
      %p45 = por %p43, %p44
      %s47 = sadd.s32 %s46, 1
      %p50 = scmp.eq.s32.totalorder %s12, 1
      %p51 = scmp.ne.s32.totalorder %s46, %s48
      %p52 = scmp.eq.s32.totalorder %s12, 0
      %p53 = por %p51, %p52
      %p54 = scmp.ne.s32.totalorder %s46, %s48
      %p55 = scmp.eq.s32.totalorder %s17, 1
      %p56 = por %p54, %p55
      %p57 = scmp.ne.s32.totalorder %s48, %s49
      %p58 = scmp.eq.s32.totalorder %s17, 0
      %p59 = por %p57, %p58
      %p60 = scmp.ne.s32.totalorder %s48, %s49
      %p61 = scmp.eq.s32.totalorder %s18, 1
      %p62 = por %p60, %p61
      %p64 = scmp.ne.s32.totalorder %s49, %s63
      %p65 = scmp.eq.s32.totalorder %s18, 0
      %p66 = por %p64, %p65
      %s68 = sadd.s32 %s67, 1
      %p71 = scmp.eq.s32.totalorder %s12, 1
      %p72 = scmp.ne.s32.totalorder %s67, %s69
      %p73 = scmp.eq.s32.totalorder %s12, 0
      %p74 = por %p72, %p73
      %p75 = scmp.ne.s32.totalorder %s67, %s69
      %p76 = scmp.eq.s32.totalorder %s17, 1
      %p77 = por %p75, %p76
      %p78 = scmp.ne.s32.totalorder %s69, %s70
      %p79 = scmp.eq.s32.totalorder %s17, 0
      %p80 = por %p78, %p79
      %p81 = scmp.ne.s32.totalorder %s69, %s70
      %p82 = scmp.eq.s32.totalorder %s18, 1
      %p83 = por %p81, %p82
      %p85 = scmp.ne.s32.totalorder %s70, %s84
      %p86 = scmp.eq.s32.totalorder %s18, 0
      %p87 = por %p85, %p86
      %s88 = ssub.s32 %s12, %s19
      %p89 = scmp.eq.s32.totalorder %s88, 0
      %s91 = sadd.s32 %s90, 1
      %s92 = scalar_select %p89, %s90, %s91
      %p95 = pneg %p89
      %p96 = scmp.eq.s32.totalorder %s12, 1
      %p97 = por %p95, %p96
      %p98 = scmp.ne.s32.totalorder %s90, %s93
      %p99 = scmp.eq.s32.totalorder %s12, 0
      %p100 = por %p98, %p99
      %p101 = scmp.ne.s32.totalorder %s90, %s93
      %p102 = scmp.eq.s32.totalorder %s17, 1
      %p103 = por %p101, %p102
      %p104 = scmp.ne.s32.totalorder %s93, %s94
      %p105 = scmp.eq.s32.totalorder %s17, 0
      %p106 = por %p104, %p105
      %p107 = scmp.ne.s32.totalorder %s93, %s94
      %p108 = scmp.eq.s32.totalorder %s18, 1
      %p109 = por %p107, %p108
      %p111 = scmp.ne.s32.totalorder %s94, %s110
      %p112 = scmp.eq.s32.totalorder %s18, 0
      %p113 = por %p111, %p112
      %p114 = scmp.le.s32.totalorder 1, %s12
      %p115 = scmp.lt.s32.totalorder %s12, 3
      %p116 = pnand %p114, %p115
      %p117 = pneg %p116
      // Predicated region
      $region9: #{optical_flow_encoder.1} parent=5 // pred_check
        _
      $region10: #{optical_flow_encoder.1} parent=5 // pred_check_branch
        %119 = sbr.rel (%p116) target = $region12
      $region11: #{optical_flow_encoder.1} parent=5 // pred_region
        %s120 = ssub.s32 %s12, 1
        // Predicated region
        $region13: #{optical_flow_encoder.1} parent=11 // pred_check
          %p121 = pneg %p59
        $region14: #{optical_flow_encoder.1} parent=11 // pred_check_branch
          %123 = sbr.rel (%p121) target = $region16
        $region15: #{optical_flow_encoder.1} parent=11 // pred_region
          _
        $region16: #{optical_flow_encoder.1} parent=11 // pred_fallthru
          _
        // Predicated region
        $region17: #{optical_flow_encoder.1} parent=11 // pred_check
          %p124 = pneg %p80
        $region18: #{optical_flow_encoder.1} parent=11 // pred_check_branch
          %126 = sbr.rel (%p124) target = $region20
        $region19: #{optical_flow_encoder.1} parent=11 // pred_region
          _
        $region20: #{optical_flow_encoder.1} parent=11 // pred_fallthru
          _
      $region12: #{optical_flow_encoder.1} parent=5 // pred_fallthru
        _
      %p127 = scmp.lt.s32.totalorder %s12, 2
      // Predicated region
      $region21: #{optical_flow_encoder.1} parent=5 // pred_check
        %p128 = pneg %p127
      $region22: #{optical_flow_encoder.1} parent=5 // pred_check_branch
        %130 = sbr.rel (%p128) target = $region24
      $region23: #{optical_flow_encoder.1} parent=5 // pred_region
        // Predicated region
        $region25: #{optical_flow_encoder.1} parent=23 // pred_check
          %p131 = pneg %p32
        $region26: #{optical_flow_encoder.1} parent=23 // pred_check_branch
          %133 = sbr.rel (%p131) target = $region28
        $region27: #{optical_flow_encoder.1} parent=23 // pred_region
          %p134 = scmp.lt.s32.totalorder %s12, 1
          %s135 = scalar_select %p134, %s12, 1
          %s136 = smul.addr %s135, 9
          %s137 = smul.addr %s136, 4
          %s138 = scalar_lea.vmem %s0, %s137
        $region28: #{optical_flow_encoder.1} parent=23 // pred_fallthru
          _
      $region24: #{optical_flow_encoder.1} parent=5 // pred_fallthru
        _
      %p139 = scmp.le.s32.totalorder 1, %s12
      %p140 = scmp.lt.s32.totalorder %s12, 3
      %p141 = pnand %p139, %p140
      %p142 = pneg %p141
      // Predicated region
      $region29: #{optical_flow_encoder.1} parent=5 // pred_check
        _
      $region30: #{optical_flow_encoder.1} parent=5 // pred_check_branch
        %144 = sbr.rel (%p141) target = $region32
      $region31: #{optical_flow_encoder.1} parent=5 // pred_region
        %s145 = ssub.s32 %s12, 1
        %p146 = scmp.lt.s32.totalorder %s17, 1
        %s147 = scalar_select %p146, %s17, 1
        %s148 = smul.addr %s147, 9
        %s149 = smul.addr %s148, 4
        %s150 = scalar_lea.vmem %s0, %s149
        %p151 = pneg %p38
        %p152 = pneg %p35
        %p153 = pneg %p59
        %p154 = pneg %p56
        %p155 = pneg %p80
        %p156 = pneg %p77
        %p157 = pneg %p106
        %p158 = pneg %p103
        %s159 = sand.u32 %s93, 1
        %s160 = scalar_lea.sflag [#allocation3], %s159
        %s161 = sand.u32 %s93, 1
        %s162 = smul.addr %s161, 8
        %s163 = scalar_lea.vmem [#allocation2], %s162
        %p164 = scmp.lt.s32.totalorder %s17, 1
        %s165 = scalar_select %p164, %s17, 1
        %s166 = smul.addr %s165, 9
        %s167 = smul.addr %s166, 4
        %s168 = scalar_lea.vmem %s0, %s167
        %v170 = vld [vmem:[%s168] sm:$0xff]
        %v171 = vld [vmem:[%s168 + $0x8] sm:$0xff]
        %v172 = vld [vmem:[%s168 + $0x10] sm:$0xff]
        %v173 = vld [vmem:[%s168 + $0x18] sm:$0xff]
        %v174 = vld [vmem:[%s168 + $0x20] sm:$0xf]
        %v175 = vld [vmem:[%s1] sm:$0xf]
        %v176 = vld [vmem:[%s1 + $0x4] sm:$0xf]
        %v177 = vld [vmem:[%s1 + $0x8] sm:$0xf]
        %v178 = vld [vmem:[%s1 + $0xc] sm:$0xf]
        %v179 = vld [vmem:[%s1 + $0x10] sm:$0xf]
        %v180 = vld [vmem:[%s1 + $0x14] sm:$0xf]
        %v181 = vld [vmem:[%s1 + $0x18] sm:$0xf]
        %v182 = vld [vmem:[%s1 + $0x1c] sm:$0xf]
        %v183 = vld [vmem:[%s1 + $0x20] sm:$0xf]
        %v184 = vld [vmem:[%s1 + $0x24] sm:$0xf]
        %v185 = vld [vmem:[%s1 + $0x28] sm:$0xf]
        %v186 = vld [vmem:[%s1 + $0x2c] sm:$0xf]
        %v187 = vld [vmem:[%s1 + $0x30] sm:$0xf]
        %v188 = vld [vmem:[%s1 + $0x34] sm:$0xf]
        %v189 = vld [vmem:[%s1 + $0x38] sm:$0xf]
        %v190 = vld [vmem:[%s1 + $0x3c] sm:$0xf]
        %v191 = vld [vmem:[%s1 + $0x40] sm:$0xf]
        %v192 = vld [vmem:[%s1 + $0x44] sm:$0xf]
        %v193 = vld [vmem:[%s1 + $0x48] sm:$0xf]
        %v194 = vld [vmem:[%s1 + $0x4c] sm:$0xf]
        %v195 = vld [vmem:[%s1 + $0x50] sm:$0xf]
        %v196 = vld [vmem:[%s1 + $0x54] sm:$0xf]
        %v197 = vld [vmem:[%s1 + $0x58] sm:$0xf]
        %v198 = vld [vmem:[%s1 + $0x5c] sm:$0xf]
        %v199 = vld [vmem:[%s1 + $0x60] sm:$0xf]
        %v200 = vld [vmem:[%s1 + $0x64] sm:$0xf]
        %v201 = vld [vmem:[%s1 + $0x68] sm:$0xf]
        %v202 = vld [vmem:[%s1 + $0x6c] sm:$0xf]
        %v203 = vld [vmem:[%s1 + $0x70] sm:$0xf]
        %v204 = vld [vmem:[%s1 + $0x74] sm:$0xf]
        %v205 = vld [vmem:[%s1 + $0x78] sm:$0xf]
        %v206 = vld [vmem:[%s1 + $0x7c] sm:$0xf]
        %v207 = vld [vmem:[%s1 + $0x80] sm:$0xf]
        %v208 = vld [vmem:[%s1 + $0x84] sm:$0xf]
        %v209 = vld [vmem:[%s1 + $0x88] sm:$0xf]
        %v210 = vld [vmem:[%s1 + $0x8c] sm:$0xf]
        %v211 = vld [vmem:[%s1 + $0x90] sm:$0xf]
        %v212 = vld [vmem:[%s1 + $0x94] sm:$0xf]
        %v213 = vld [vmem:[%s1 + $0x98] sm:$0xf]
        %v214 = vld [vmem:[%s1 + $0x9c] sm:$0xf]
        %v215 = vld [vmem:[%s1 + $0xa0] sm:$0xf]
        %v216 = vld [vmem:[%s1 + $0xa4] sm:$0xf]
        %v217 = vld [vmem:[%s1 + $0xa8] sm:$0xf]
        %v218 = vld [vmem:[%s1 + $0xac] sm:$0xf]
        %v219 = vld [vmem:[%s1 + $0xb0] sm:$0xf]
        %v220 = vld [vmem:[%s1 + $0xb4] sm:$0xf]
        %v221 = vld [vmem:[%s1 + $0xb8] sm:$0xf]
        %v222 = vld [vmem:[%s1 + $0xbc] sm:$0xf]
        %v223 = vld [vmem:[%s1 + $0xc0] sm:$0xf]
        %v224 = vld [vmem:[%s1 + $0xc4] sm:$0xf]
        %v225 = vld [vmem:[%s1 + $0xc8] sm:$0xf]
        %v226 = vld [vmem:[%s1 + $0xcc] sm:$0xf]
        %v227 = vld [vmem:[%s1 + $0xd0] sm:$0xf]
        %v228 = vld [vmem:[%s1 + $0xd4] sm:$0xf]
        %v229 = vld [vmem:[%s1 + $0xd8] sm:$0xf]
        %v230 = vld [vmem:[%s1 + $0xdc] sm:$0xf]
        %v231 = vld [vmem:[%s1 + $0xe0] sm:$0xf]
        %v232 = vld [vmem:[%s1 + $0xe4] sm:$0xf]
        %v233 = vld [vmem:[%s1 + $0xe8] sm:$0xf]
        %v234 = vld [vmem:[%s1 + $0xec] sm:$0xf]
        %v235 = vld [vmem:[%s1 + $0xf0] sm:$0xf]
        %v236 = vld [vmem:[%s1 + $0xf4] sm:$0xf]
        %v237 = vld [vmem:[%s1 + $0xf8] sm:$0xf]
        %v238 = vld [vmem:[%s1 + $0xfc] sm:$0xf]
        %v239 = vld [vmem:[%s1 + $0x100] sm:$0xf]
        %v240 = vld [vmem:[%s1 + $0x104] sm:$0xf]
        %v241 = vld [vmem:[%s1 + $0x108] sm:$0xf]
        %v242 = vld [vmem:[%s1 + $0x10c] sm:$0xf]
        %v243 = vld [vmem:[%s1 + $0x110] sm:$0xf]
        %v244 = vld [vmem:[%s1 + $0x114] sm:$0xf]
        %v245 = vld [vmem:[%s1 + $0x118] sm:$0xf]
        %v246 = vld [vmem:[%s1 + $0x11c] sm:$0xf]
        %v247 = vld [vmem:[%s1 + $0x120] sm:$0xf]
        %v248 = vld [vmem:[%s1 + $0x124] sm:$0xf]
        %v249 = vld [vmem:[%s1 + $0x128] sm:$0xf]
        %v250 = vld [vmem:[%s1 + $0x12c] sm:$0xf]
        %v251 = vld [vmem:[%s1 + $0x130] sm:$0xf]
        %v252 = vld [vmem:[%s1 + $0x134] sm:$0xf]
        %v253 = vld [vmem:[%s1 + $0x138] sm:$0xf]
        %v254 = vld [vmem:[%s1 + $0x13c] sm:$0xf]
        %v255 = vld [vmem:[%s1 + $0x140] sm:$0xf]
        %v256 = vld [vmem:[%s1 + $0x144] sm:$0xf]
        %v257 = vld [vmem:[%s1 + $0x148] sm:$0xf]
        %v258 = vld [vmem:[%s1 + $0x14c] sm:$0xf]
        %v259 = vld [vmem:[%s1 + $0x150] sm:$0xf]
        %v260 = vld [vmem:[%s1 + $0x154] sm:$0xf]
        %v261 = vld [vmem:[%s1 + $0x158] sm:$0xf]
        %v262 = vld [vmem:[%s1 + $0x15c] sm:$0xf]
        %v263 = vld [vmem:[%s1 + $0x160] sm:$0xf]
        %v264 = vld [vmem:[%s1 + $0x164] sm:$0xf]
        %v265 = vld [vmem:[%s1 + $0x168] sm:$0xf]
        %v266 = vld [vmem:[%s1 + $0x16c] sm:$0xf]
        %v267 = vld [vmem:[%s1 + $0x170] sm:$0xf]
        %v268 = vld [vmem:[%s1 + $0x174] sm:$0xf]
        %v269 = vld [vmem:[%s1 + $0x178] sm:$0xf]
        %v270 = vld [vmem:[%s1 + $0x17c] sm:$0xf]
        %v271 = vld [vmem:[%s1 + $0x180] sm:$0xf]
        %v272 = vld [vmem:[%s1 + $0x184] sm:$0xf]
        %v273 = vld [vmem:[%s1 + $0x188] sm:$0xf]
        %v274 = vld [vmem:[%s1 + $0x18c] sm:$0xf]
        %v275 = vld [vmem:[%s1 + $0x190] sm:$0xf]
        %v276 = vld [vmem:[%s1 + $0x194] sm:$0xf]
        %v277 = vld [vmem:[%s1 + $0x198] sm:$0xf]
        %v278 = vld [vmem:[%s1 + $0x19c] sm:$0xf]
        %v279 = vld [vmem:[%s1 + $0x1a0] sm:$0xf]
        %v280 = vld [vmem:[%s1 + $0x1a4] sm:$0xf]
        %v281 = vld [vmem:[%s1 + $0x1a8] sm:$0xf]
        %v282 = vld [vmem:[%s1 + $0x1ac] sm:$0xf]
        %v283 = vld [vmem:[%s1 + $0x1b0] sm:$0xf]
        %v284 = vld [vmem:[%s1 + $0x1b4] sm:$0xf]
        %v285 = vld [vmem:[%s1 + $0x1b8] sm:$0xf]
        %v286 = vld [vmem:[%s1 + $0x1bc] sm:$0xf]
        %v287 = vld [vmem:[%s1 + $0x1c0] sm:$0xf]
        %v288 = vld [vmem:[%s1 + $0x1c4] sm:$0xf]
        %v289 = vld [vmem:[%s1 + $0x1c8] sm:$0xf]
        %v290 = vld [vmem:[%s1 + $0x1cc] sm:$0xf]
        %v291 = vld [vmem:[%s1 + $0x1d0] sm:$0xf]
        %v292 = vld [vmem:[%s1 + $0x1d4] sm:$0xf]
        %v293 = vld [vmem:[%s1 + $0x1d8] sm:$0xf]
        %v294 = vld [vmem:[%s1 + $0x1dc] sm:$0xf]
        %v295 = vld [vmem:[%s1 + $0x1e0] sm:$0xf]
        %v296 = vld [vmem:[%s1 + $0x1e4] sm:$0xf]
        %v297 = vld [vmem:[%s1 + $0x1e8] sm:$0xf]
        %v298 = vld [vmem:[%s1 + $0x1ec] sm:$0xf]
        %v299 = vld [vmem:[%s1 + $0x1f0] sm:$0xf]
        %v300 = vld [vmem:[%s1 + $0x1f4] sm:$0xf]
        %v301 = vld [vmem:[%s1 + $0x1f8] sm:$0xf]
        %v302 = vld [vmem:[%s1 + $0x1fc] sm:$0xf]
        %v303 = vld [vmem:[%s1 + $0x200] sm:$0xf]
        %v304 = vld [vmem:[%s1 + $0x204] sm:$0xf]
        %v305 = vld [vmem:[%s1 + $0x208] sm:$0xf]
        %v306 = vld [vmem:[%s1 + $0x20c] sm:$0xf]
        %v307 = vld [vmem:[%s1 + $0x210] sm:$0xf]
        %v308 = vld [vmem:[%s1 + $0x214] sm:$0xf]
        %v309 = vld [vmem:[%s1 + $0x218] sm:$0xf]
        %v310 = vld [vmem:[%s1 + $0x21c] sm:$0xf]
        %v311 = vld [vmem:[%s1 + $0x220] sm:$0xf]
        %v312 = vld [vmem:[%s1 + $0x224] sm:$0xf]
        %v313 = vld [vmem:[%s1 + $0x228] sm:$0xf]
        %v314 = vld [vmem:[%s1 + $0x22c] sm:$0xf]
        %v315 = vld [vmem:[%s1 + $0x230] sm:$0xf]
        %v316 = vld [vmem:[%s1 + $0x234] sm:$0xf]
        %v317 = vld [vmem:[%s1 + $0x238] sm:$0xf]
        %v318 = vld [vmem:[%s1 + $0x23c] sm:$0xf]
        %v319 = vld [vmem:[%s2] sm:$0x1]
        %v321 = vlaneseq
        %v322 = vshrl.u32 %v321, 7
        %v323 = vsub.s32 0, %v322
        %v324 = vrot.slane %v319, %v323
        %v331 = vunpack.c.l.b16 %v170
        %v332 = vunpack.c.h.b16 %v170
        %v333 = vunpack.c.l.b16 %v171
        %v334 = vunpack.c.h.b16 %v171
        %v335 = vunpack.c.l.b16 %v172
        %v336 = vunpack.c.h.b16 %v172
        %v337 = vunpack.c.l.b16 %v173
        %v338 = vunpack.c.h.b16 %v173
        %v339 = vunpack.c.l.b16 %v174
        %v340 = vpack.c.b16 %v331, %v331
        %v341 = vpack.c.b16 %v332, %v332
        %v342 = vpack.c.b16 %v333, %v333
        %v343 = vpack.c.b16 %v334, %v334
        %v344 = vpack.c.b16 %v335, %v335
        %v345 = vpack.c.b16 %v336, %v336
        %v346 = vpack.c.b16 %v337, %v337
        %v347 = vpack.c.b16 %v338, %v338
        %v348 = vpack.c.b16 %v339, %v339
        %v502 = vunpack.c.l.b16 %v175
        %v503 = vunpack.c.l.b16 %v176
        %v504 = vunpack.c.l.b16 %v177
        %v505 = vunpack.c.l.b16 %v178
        %v506 = vunpack.c.l.b16 %v179
        %v507 = vunpack.c.l.b16 %v180
        %v508 = vunpack.c.l.b16 %v181
        %v509 = vunpack.c.l.b16 %v182
        %v510 = vunpack.c.l.b16 %v183
        %v511 = vunpack.c.l.b16 %v184
        %v512 = vunpack.c.l.b16 %v185
        %v513 = vunpack.c.l.b16 %v186
        %v514 = vunpack.c.l.b16 %v187
        %v515 = vunpack.c.l.b16 %v188
        %v516 = vunpack.c.l.b16 %v189
        %v517 = vunpack.c.l.b16 %v190
        %v518 = vunpack.c.l.b16 %v191
        %v519 = vunpack.c.l.b16 %v192
        %v520 = vunpack.c.l.b16 %v193
        %v521 = vunpack.c.l.b16 %v194
        %v522 = vunpack.c.l.b16 %v195
        %v523 = vunpack.c.l.b16 %v196
        %v524 = vunpack.c.l.b16 %v197
        %v525 = vunpack.c.l.b16 %v198
        %v526 = vunpack.c.l.b16 %v199
        %v527 = vunpack.c.l.b16 %v200
        %v528 = vunpack.c.l.b16 %v201
        %v529 = vunpack.c.l.b16 %v202
        %v530 = vunpack.c.l.b16 %v203
        %v531 = vunpack.c.l.b16 %v204
        %v532 = vunpack.c.l.b16 %v205
        %v533 = vunpack.c.l.b16 %v206
        %v534 = vunpack.c.l.b16 %v207
        %v535 = vunpack.c.l.b16 %v208
        %v536 = vunpack.c.l.b16 %v209
        %v537 = vunpack.c.l.b16 %v210
        %v538 = vunpack.c.l.b16 %v211
        %v539 = vunpack.c.l.b16 %v212
        %v540 = vunpack.c.l.b16 %v213
        %v541 = vunpack.c.l.b16 %v214
        %v542 = vunpack.c.l.b16 %v215
        %v543 = vunpack.c.l.b16 %v216
        %v544 = vunpack.c.l.b16 %v217
        %v545 = vunpack.c.l.b16 %v218
        %v546 = vunpack.c.l.b16 %v219
        %v547 = vunpack.c.l.b16 %v220
        %v548 = vunpack.c.l.b16 %v221
        %v549 = vunpack.c.l.b16 %v222
        %v550 = vunpack.c.l.b16 %v223
        %v551 = vunpack.c.l.b16 %v224
        %v552 = vunpack.c.l.b16 %v225
        %v553 = vunpack.c.l.b16 %v226
        %v554 = vunpack.c.l.b16 %v227
        %v555 = vunpack.c.l.b16 %v228
        %v556 = vunpack.c.l.b16 %v229
        %v557 = vunpack.c.l.b16 %v230
        %v558 = vunpack.c.l.b16 %v231
        %v559 = vunpack.c.l.b16 %v232
        %v560 = vunpack.c.l.b16 %v233
        %v561 = vunpack.c.l.b16 %v234
        %v562 = vunpack.c.l.b16 %v235
        %v563 = vunpack.c.l.b16 %v236
        %v564 = vunpack.c.l.b16 %v237
        %v565 = vunpack.c.l.b16 %v238
        %v566 = vunpack.c.l.b16 %v239
        %v567 = vunpack.c.l.b16 %v240
        %v568 = vunpack.c.l.b16 %v241
        %v569 = vunpack.c.l.b16 %v242
        %v570 = vunpack.c.l.b16 %v243
        %v571 = vunpack.c.l.b16 %v244
        %v572 = vunpack.c.l.b16 %v245
        %v573 = vunpack.c.l.b16 %v246
        %v574 = vunpack.c.l.b16 %v247
        %v575 = vunpack.c.l.b16 %v248
        %v576 = vunpack.c.l.b16 %v249
        %v577 = vunpack.c.l.b16 %v250
        %v578 = vunpack.c.l.b16 %v251
        %v579 = vunpack.c.l.b16 %v252
        %v580 = vunpack.c.l.b16 %v253
        %v581 = vunpack.c.l.b16 %v254
        %v582 = vunpack.c.l.b16 %v255
        %v583 = vunpack.c.l.b16 %v256
        %v584 = vunpack.c.l.b16 %v257
        %v585 = vunpack.c.l.b16 %v258
        %v586 = vunpack.c.l.b16 %v259
        %v587 = vunpack.c.l.b16 %v260
        %v588 = vunpack.c.l.b16 %v261
        %v589 = vunpack.c.l.b16 %v262
        %v590 = vunpack.c.l.b16 %v263
        %v591 = vunpack.c.l.b16 %v264
        %v592 = vunpack.c.l.b16 %v265
        %v593 = vunpack.c.l.b16 %v266
        %v594 = vunpack.c.l.b16 %v267
        %v595 = vunpack.c.l.b16 %v268
        %v596 = vunpack.c.l.b16 %v269
        %v597 = vunpack.c.l.b16 %v270
        %v598 = vunpack.c.l.b16 %v271
        %v599 = vunpack.c.l.b16 %v272
        %v600 = vunpack.c.l.b16 %v273
        %v601 = vunpack.c.l.b16 %v274
        %v602 = vunpack.c.l.b16 %v275
        %v603 = vunpack.c.l.b16 %v276
        %v604 = vunpack.c.l.b16 %v277
        %v605 = vunpack.c.l.b16 %v278
        %v606 = vunpack.c.l.b16 %v279
        %v607 = vunpack.c.l.b16 %v280
        %v608 = vunpack.c.l.b16 %v281
        %v609 = vunpack.c.l.b16 %v282
        %v610 = vunpack.c.l.b16 %v283
        %v611 = vunpack.c.l.b16 %v284
        %v612 = vunpack.c.l.b16 %v285
        %v613 = vunpack.c.l.b16 %v286
        %v614 = vunpack.c.l.b16 %v287
        %v615 = vunpack.c.l.b16 %v288
        %v616 = vunpack.c.l.b16 %v289
        %v617 = vunpack.c.l.b16 %v290
        %v618 = vunpack.c.l.b16 %v291
        %v619 = vunpack.c.l.b16 %v292
        %v620 = vunpack.c.l.b16 %v293
        %v621 = vunpack.c.l.b16 %v294
        %v622 = vunpack.c.l.b16 %v295
        %v623 = vunpack.c.l.b16 %v296
        %v624 = vunpack.c.l.b16 %v297
        %v625 = vunpack.c.l.b16 %v298
        %v626 = vunpack.c.l.b16 %v299
        %v627 = vunpack.c.l.b16 %v300
        %v628 = vunpack.c.l.b16 %v301
        %v629 = vunpack.c.l.b16 %v302
        %v630 = vunpack.c.l.b16 %v303
        %v631 = vunpack.c.l.b16 %v304
        %v632 = vunpack.c.l.b16 %v305
        %v633 = vunpack.c.l.b16 %v306
        %v634 = vunpack.c.l.b16 %v307
        %v635 = vunpack.c.l.b16 %v308
        %v636 = vunpack.c.l.b16 %v309
        %v637 = vunpack.c.l.b16 %v310
        %v638 = vunpack.c.l.b16 %v311
        %v639 = vunpack.c.l.b16 %v312
        %v640 = vunpack.c.l.b16 %v313
        %v641 = vunpack.c.l.b16 %v314
        %v642 = vunpack.c.l.b16 %v315
        %v643 = vunpack.c.l.b16 %v316
        %v644 = vunpack.c.l.b16 %v317
        %v645 = vunpack.c.l.b16 %v318
        %v646 = vpack.c.b16 %v503, %v502
        %v647 = vpack.c.b16 %v505, %v504
        %v648 = vpack.c.b16 %v507, %v506
        %v649 = vpack.c.b16 %v509, %v508
        %v650 = vpack.c.b16 %v511, %v510
        %v651 = vpack.c.b16 %v513, %v512
        %v652 = vpack.c.b16 %v515, %v514
        %v653 = vpack.c.b16 %v517, %v516
        %v654 = vpack.c.b16 %v519, %v518
        %v655 = vpack.c.b16 %v521, %v520
        %v656 = vpack.c.b16 %v523, %v522
        %v657 = vpack.c.b16 %v525, %v524
        %v658 = vpack.c.b16 %v527, %v526
        %v659 = vpack.c.b16 %v529, %v528
        %v660 = vpack.c.b16 %v531, %v530
        %v661 = vpack.c.b16 %v533, %v532
        %v662 = vpack.c.b16 %v535, %v534
        %v663 = vpack.c.b16 %v537, %v536
        %v664 = vpack.c.b16 %v539, %v538
        %v665 = vpack.c.b16 %v541, %v540
        %v666 = vpack.c.b16 %v543, %v542
        %v667 = vpack.c.b16 %v545, %v544
        %v668 = vpack.c.b16 %v547, %v546
        %v669 = vpack.c.b16 %v549, %v548
        %v670 = vpack.c.b16 %v551, %v550
        %v671 = vpack.c.b16 %v553, %v552
        %v672 = vpack.c.b16 %v555, %v554
        %v673 = vpack.c.b16 %v557, %v556
        %v674 = vpack.c.b16 %v559, %v558
        %v675 = vpack.c.b16 %v561, %v560
        %v676 = vpack.c.b16 %v563, %v562
        %v677 = vpack.c.b16 %v565, %v564
        %v678 = vpack.c.b16 %v567, %v566
        %v679 = vpack.c.b16 %v569, %v568
        %v680 = vpack.c.b16 %v571, %v570
        %v681 = vpack.c.b16 %v573, %v572
        %v682 = vpack.c.b16 %v575, %v574
        %v683 = vpack.c.b16 %v577, %v576
        %v684 = vpack.c.b16 %v579, %v578
        %v685 = vpack.c.b16 %v581, %v580
        %v686 = vpack.c.b16 %v583, %v582
        %v687 = vpack.c.b16 %v585, %v584
        %v688 = vpack.c.b16 %v587, %v586
        %v689 = vpack.c.b16 %v589, %v588
        %v690 = vpack.c.b16 %v591, %v590
        %v691 = vpack.c.b16 %v593, %v592
        %v692 = vpack.c.b16 %v595, %v594
        %v693 = vpack.c.b16 %v597, %v596
        %v694 = vpack.c.b16 %v599, %v598
        %v695 = vpack.c.b16 %v601, %v600
        %v696 = vpack.c.b16 %v603, %v602
        %v697 = vpack.c.b16 %v605, %v604
        %v698 = vpack.c.b16 %v607, %v606
        %v699 = vpack.c.b16 %v609, %v608
        %v700 = vpack.c.b16 %v611, %v610
        %v701 = vpack.c.b16 %v613, %v612
        %v702 = vpack.c.b16 %v615, %v614
        %v703 = vpack.c.b16 %v617, %v616
        %v704 = vpack.c.b16 %v619, %v618
        %v705 = vpack.c.b16 %v621, %v620
        %v706 = vpack.c.b16 %v623, %v622
        %v707 = vpack.c.b16 %v625, %v624
        %v708 = vpack.c.b16 %v627, %v626
        %v709 = vpack.c.b16 %v629, %v628
        %v710 = vpack.c.b16 %v631, %v630
        %v711 = vpack.c.b16 %v633, %v632
        %v712 = vpack.c.b16 %v635, %v634
        %v713 = vpack.c.b16 %v637, %v636
        %v714 = vpack.c.b16 %v639, %v638
        %v715 = vpack.c.b16 %v641, %v640
        %v716 = vpack.c.b16 %v643, %v642
        %v717 = vpack.c.b16 %v645, %v644
        %790 = vmatprep.subr.bf16.mxu0 0
        %791 = vmatpush1.bf16.msra.mxu0 %v646
        %792 = vmatprep.subr.bf16.mxu0 0
        %793 = vmatpush1.bf16.msra.mxu0 %v647
        %794 = vmatprep.subr.bf16.mxu0 0
        %795 = vmatpush1.bf16.msra.mxu0 %v648
        %796 = vmatprep.subr.bf16.mxu0 0
        %797 = vmatpush1.bf16.msra.mxu0 %v649
        %798 = vmatprep.subr.bf16.mxu0 0
        %799 = vmatpush1.bf16.msra.mxu0 %v650
        %800 = vmatprep.subr.bf16.mxu0 0
        %801 = vmatpush1.bf16.msra.mxu0 %v651
        %802 = vmatprep.subr.bf16.mxu0 0
        %803 = vmatpush1.bf16.msra.mxu0 %v652
        %804 = vmatprep.subr.bf16.mxu0 0
        %805 = vmatpush1.bf16.msra.mxu0 %v653
        %806 = vmatprep.subr.bf16.mxu0 0
        %807 = vmatpush1.bf16.msra.mxu0 %v654
        %808 = vmatprep.subr.bf16.mxu0 0
        %809 = vmatpush1.bf16.msra.mxu0 %v655
        %810 = vmatprep.subr.bf16.mxu0 0
        %811 = vmatpush1.bf16.msra.mxu0 %v656
        %812 = vmatprep.subr.bf16.mxu0 0
        %813 = vmatpush1.bf16.msra.mxu0 %v657
        %814 = vmatprep.subr.bf16.mxu0 0
        %815 = vmatpush1.bf16.msra.mxu0 %v658
        %816 = vmatprep.subr.bf16.mxu0 0
        %817 = vmatpush1.bf16.msra.mxu0 %v659
        %818 = vmatprep.subr.bf16.mxu0 0
        %819 = vmatpush1.bf16.msra.mxu0 %v660
        %820 = vmatprep.subr.bf16.mxu0 0
        %821 = vmatpush1.bf16.msra.mxu0 %v661
        %822 = vmatprep.mubr.bf16.mxu0 %v341
        %823 = vmatmul.mubr.bf16.gmra.mrb[0].mxu0 %v340
        %v824 = vpop.f32.mrb[0].mxu0
        %v825 = vadd.f32 %v324, %v824
        %v826 = vpop.f32.mrb[0].mxu0
        %v827 = vpop.f32.mrb[0].mxu0
        %v828 = vpop.f32.mrb[0].mxu0
        %829 = vdwg.mxu0
        %830 = vmatprep.subr.bf16.mxu0 0
        %831 = vmatpush1.bf16.msra.mxu0 %v662
        %832 = vmatprep.subr.bf16.mxu0 0
        %833 = vmatpush1.bf16.msra.mxu0 %v663
        %834 = vmatprep.subr.bf16.mxu0 0
        %835 = vmatpush1.bf16.msra.mxu0 %v664
        %836 = vmatprep.subr.bf16.mxu0 0
        %837 = vmatpush1.bf16.msra.mxu0 %v665
        %838 = vmatprep.subr.bf16.mxu0 0
        %839 = vmatpush1.bf16.msra.mxu0 %v666
        %840 = vmatprep.subr.bf16.mxu0 0
        %841 = vmatpush1.bf16.msra.mxu0 %v667
        %842 = vmatprep.subr.bf16.mxu0 0
        %843 = vmatpush1.bf16.msra.mxu0 %v668
        %844 = vmatprep.subr.bf16.mxu0 0
        %845 = vmatpush1.bf16.msra.mxu0 %v669
        %846 = vmatprep.subr.bf16.mxu0 0
        %847 = vmatpush1.bf16.msra.mxu0 %v670
        %848 = vmatprep.subr.bf16.mxu0 0
        %849 = vmatpush1.bf16.msra.mxu0 %v671
        %850 = vmatprep.subr.bf16.mxu0 0
        %851 = vmatpush1.bf16.msra.mxu0 %v672
        %852 = vmatprep.subr.bf16.mxu0 0
        %853 = vmatpush1.bf16.msra.mxu0 %v673
        %854 = vmatprep.subr.bf16.mxu0 0
        %855 = vmatpush1.bf16.msra.mxu0 %v674
        %856 = vmatprep.subr.bf16.mxu0 0
        %857 = vmatpush1.bf16.msra.mxu0 %v675
        %858 = vmatprep.subr.bf16.mxu0 0
        %859 = vmatpush1.bf16.msra.mxu0 %v676
        %860 = vmatprep.subr.bf16.mxu0 0
        %861 = vmatpush1.bf16.msra.mxu0 %v677
        %862 = vmatprep.mubr.bf16.mxu0 %v343
        %863 = vmatmul.mubr.bf16.gmra.mrb[0].mxu0 %v342
        %v864 = vpop.f32.mrb[0].mxu0
        %v865 = vadd.f32 %v825, %v864
        %v866 = vpop.f32.mrb[0].mxu0
        %v867 = vpop.f32.mrb[0].mxu0
        %v868 = vpop.f32.mrb[0].mxu0
        %869 = vdwg.mxu0
        %870 = vmatprep.subr.bf16.mxu0 0
        %871 = vmatpush1.bf16.msra.mxu0 %v678
        %872 = vmatprep.subr.bf16.mxu0 0
        %873 = vmatpush1.bf16.msra.mxu0 %v679
        %874 = vmatprep.subr.bf16.mxu0 0
        %875 = vmatpush1.bf16.msra.mxu0 %v680
        %876 = vmatprep.subr.bf16.mxu0 0
        %877 = vmatpush1.bf16.msra.mxu0 %v681
        %878 = vmatprep.subr.bf16.mxu0 0
        %879 = vmatpush1.bf16.msra.mxu0 %v682
        %880 = vmatprep.subr.bf16.mxu0 0
        %881 = vmatpush1.bf16.msra.mxu0 %v683
        %882 = vmatprep.subr.bf16.mxu0 0
        %883 = vmatpush1.bf16.msra.mxu0 %v684
        %884 = vmatprep.subr.bf16.mxu0 0
        %885 = vmatpush1.bf16.msra.mxu0 %v685
        %886 = vmatprep.subr.bf16.mxu0 0
        %887 = vmatpush1.bf16.msra.mxu0 %v686
        %888 = vmatprep.subr.bf16.mxu0 0
        %889 = vmatpush1.bf16.msra.mxu0 %v687
        %890 = vmatprep.subr.bf16.mxu0 0
        %891 = vmatpush1.bf16.msra.mxu0 %v688
        %892 = vmatprep.subr.bf16.mxu0 0
        %893 = vmatpush1.bf16.msra.mxu0 %v689
        %894 = vmatprep.subr.bf16.mxu0 0
        %895 = vmatpush1.bf16.msra.mxu0 %v690
        %896 = vmatprep.subr.bf16.mxu0 0
        %897 = vmatpush1.bf16.msra.mxu0 %v691
        %898 = vmatprep.subr.bf16.mxu0 0
        %899 = vmatpush1.bf16.msra.mxu0 %v692
        %900 = vmatprep.subr.bf16.mxu0 0
        %901 = vmatpush1.bf16.msra.mxu0 %v693
        %902 = vmatprep.mubr.bf16.mxu0 %v345
        %903 = vmatmul.mubr.bf16.gmra.mrb[0].mxu0 %v344
        %v904 = vpop.f32.mrb[0].mxu0
        %v905 = vadd.f32 %v865, %v904
        %v906 = vpop.f32.mrb[0].mxu0
        %v907 = vpop.f32.mrb[0].mxu0
        %v908 = vpop.f32.mrb[0].mxu0
        %909 = vdwg.mxu0
        %910 = vmatprep.subr.bf16.mxu0 0
        %911 = vmatpush1.bf16.msra.mxu0 %v694
        %912 = vmatprep.subr.bf16.mxu0 0
        %913 = vmatpush1.bf16.msra.mxu0 %v695
        %914 = vmatprep.subr.bf16.mxu0 0
        %915 = vmatpush1.bf16.msra.mxu0 %v696
        %916 = vmatprep.subr.bf16.mxu0 0
        %917 = vmatpush1.bf16.msra.mxu0 %v697
        %918 = vmatprep.subr.bf16.mxu0 0
        %919 = vmatpush1.bf16.msra.mxu0 %v698
        %920 = vmatprep.subr.bf16.mxu0 0
        %921 = vmatpush1.bf16.msra.mxu0 %v699
        %922 = vmatprep.subr.bf16.mxu0 0
        %923 = vmatpush1.bf16.msra.mxu0 %v700
        %924 = vmatprep.subr.bf16.mxu0 0
        %925 = vmatpush1.bf16.msra.mxu0 %v701
        %926 = vmatprep.subr.bf16.mxu0 0
        %927 = vmatpush1.bf16.msra.mxu0 %v702
        %928 = vmatprep.subr.bf16.mxu0 0
        %929 = vmatpush1.bf16.msra.mxu0 %v703
        %930 = vmatprep.subr.bf16.mxu0 0
        %931 = vmatpush1.bf16.msra.mxu0 %v704
        %932 = vmatprep.subr.bf16.mxu0 0
        %933 = vmatpush1.bf16.msra.mxu0 %v705
        %934 = vmatprep.subr.bf16.mxu0 0
        %935 = vmatpush1.bf16.msra.mxu0 %v706
        %936 = vmatprep.subr.bf16.mxu0 0
        %937 = vmatpush1.bf16.msra.mxu0 %v707
        %938 = vmatprep.subr.bf16.mxu0 0
        %939 = vmatpush1.bf16.msra.mxu0 %v708
        %940 = vmatprep.subr.bf16.mxu0 0
        %941 = vmatpush1.bf16.msra.mxu0 %v709
        %942 = vmatprep.mubr.bf16.mxu0 %v347
        %943 = vmatmul.mubr.bf16.gmra.mrb[0].mxu0 %v346
        %v944 = vpop.f32.mrb[0].mxu0
        %v945 = vadd.f32 %v905, %v944
        %v946 = vpop.f32.mrb[0].mxu0
        %v947 = vpop.f32.mrb[0].mxu0
        %v948 = vpop.f32.mrb[0].mxu0
        %949 = vdwg.mxu0
        %950 = vmatprep.subr.bf16.mxu0 0
        %951 = vmatpush1.bf16.msra.mxu0 %v710
        %952 = vmatprep.subr.bf16.mxu0 0
        %953 = vmatpush1.bf16.msra.mxu0 %v711
        %954 = vmatprep.subr.bf16.mxu0 0
        %955 = vmatpush1.bf16.msra.mxu0 %v712
        %956 = vmatprep.subr.bf16.mxu0 0
        %957 = vmatpush1.bf16.msra.mxu0 %v713
        %958 = vmatprep.subr.bf16.mxu0 0
        %959 = vmatpush1.bf16.msra.mxu0 %v714
        %960 = vmatprep.subr.bf16.mxu0 0
        %961 = vmatpush1.bf16.msra.mxu0 %v715
        %962 = vmatprep.subr.bf16.mxu0 0
        %963 = vmatpush1.bf16.msra.mxu0 %v716
        %964 = vmatprep.subr.bf16.mxu0 0
        %965 = vmatpush1.bf16.msra.mxu0 %v717
        %966 = vmatprep.subr.bf16.mxu0 0
        %967 = vmatpush1.bf16.msra.mxu0 0
        %968 = vmatprep.subr.bf16.mxu0 0
        %969 = vmatpush1.bf16.msra.mxu0 0
        %970 = vmatprep.subr.bf16.mxu0 0
        %971 = vmatpush1.bf16.msra.mxu0 0
        %972 = vmatprep.subr.bf16.mxu0 0
        %973 = vmatpush1.bf16.msra.mxu0 0
        %974 = vmatprep.subr.bf16.mxu0 0
        %975 = vmatpush1.bf16.msra.mxu0 0
        %976 = vmatprep.subr.bf16.mxu0 0
        %977 = vmatpush1.bf16.msra.mxu0 0
        %978 = vmatprep.subr.bf16.mxu0 0
        %979 = vmatpush1.bf16.msra.mxu0 0
        %980 = vmatprep.subr.bf16.mxu0 0
        %981 = vmatpush1.bf16.msra.mxu0 0
        %982 = vmatprep.mubr.bf16.mxu0 0
        %983 = vmatmul.mubr.bf16.gmra.mrb[0].mxu0 %v348
        %v984 = vpop.f32.mrb[0].mxu0
        %v985 = vadd.f32 %v945, %v984
        %v986 = vpop.f32.mrb[0].mxu0
        %v987 = vpop.f32.mrb[0].mxu0
        %v988 = vpop.f32.mrb[0].mxu0
        %989 = vdwg.mxu0
        %990 = vst [vmem:[%s163] sm:$0xff] %v985
        %s991 = sand.u32 %s93, 1
        %s992 = scalar_lea.sflag [#allocation3], %s991
        %s993 = sand.u32 %s93, 1
        %s994 = smul.addr %s993, 8
        %s995 = scalar_lea.vmem [#allocation2], %s994
        // Predicated region
        $region33: #{optical_flow_encoder.1} parent=31 // pred_check
          %p996 = pneg %p103
        $region34: #{optical_flow_encoder.1} parent=31 // pred_check_branch
          %998 = sbr.rel (%p996) target = $region36
        $region35: #{optical_flow_encoder.1} parent=31 // pred_region
          %s1000 = ssub.s32 128, 128
          %1001 = vsyncadd %s992, %s1000
          %s1002 = smul.addr %s17, 128
          %s1003 = scalar_lea.hbm %s3, %s1002
          %s1005 = sshll.u32 %s995, 4
          %s1006 = int_to_ptr.vmem [resolvable:$true] %s1005
          %1008 = dma.vmem_to_hbm [thread:$0]  %s1006, 128, %s1003, %s992
        $region36: #{optical_flow_encoder.1} parent=31 // pred_fallthru
          _
      $region32: #{optical_flow_encoder.1} parent=5 // pred_fallthru
        _
      %p1009 = scmp.le.s32.totalorder 2, %s12
      // Predicated region
      $region37: #{optical_flow_encoder.1} parent=5 // pred_check
        %p1010 = pneg %p1009
      $region38: #{optical_flow_encoder.1} parent=5 // pred_check_branch
        %1012 = sbr.rel (%p1010) target = $region40
      $region39: #{optical_flow_encoder.1} parent=5 // pred_region
        %s1013 = ssub.s32 %s12, 2
        // Predicated region
        $region41: #{optical_flow_encoder.1} parent=39 // pred_check
          %p1014 = pneg %p109
        $region42: #{optical_flow_encoder.1} parent=39 // pred_check_branch
          %1016 = sbr.rel (%p1014) target = $region44
        $region43: #{optical_flow_encoder.1} parent=39 // pred_region
          %s1017 = sand.u32 %s94, 1
          %s1018 = scalar_lea.sflag [#allocation3], %s1017
          %s1019 = sand.u32 %s94, 1
          %s1020 = smul.addr %s1019, 8
          %s1021 = scalar_lea.vmem [#allocation2], %s1020
          %1022 = dma.done %s1018, 128
        $region44: #{optical_flow_encoder.1} parent=39 // pred_fallthru
          _
      $region40: #{optical_flow_encoder.1} parent=5 // pred_fallthru
        _
    $region6: #{optical_flow_encoder.1} parent=1 // loop_footer
      %s16 = sadd.s32 1, %s12
    $region7: #{optical_flow_encoder.1} parent=1 // loop_footer_branch
      %11 = sbr.rel target = $region3
    $region8: #{optical_flow_encoder.1} parent=1 // loop_exit
      _
    %1023 = vsyncpa [#allocation3], 1
    %s1024 = scalar_lea.sflag [#allocation3], 1
    %1025 = vsyncpa %s1024, 1

</llo_original>
